<compile_context>
chip_gen: v6e
topology: v6e:2x2x1
jax: 0.10.0
libtpu: 0.0.40
codegen_flags: <defaults>
</compile_context>

<pallas_src>
import functools
import operator

import jax
import jax.numpy as jnp
from jax import lax
from jax.experimental import pallas as pl
from jax.experimental.pallas import tpu as pltpu

_LANES = 128
_SUBLANES = 8


def _round_up(x, m):
    return (x + m - 1) // m * m


def _bce_partial(y, x, row_off, col_off, *, n_rows, n_cols, col_lo,
                 mask_rows, mask_col_hi, pos_weight):
    """Masked BCE-with-logits for one (rb, cb) block, sublane-reduced to (1, cb)."""
    x = x.astype(jnp.float32)   # logits
    y = y.astype(jnp.float32)   # binary targets
    # Numerically stable BCE-with-logits:
    #   loss = pos_weight * y * softplus(-x) + (1 - y) * softplus(x)
    #        = softplus(x) + y * (pos_weight * softplus(-x) - softplus(x))
    # softplus(x) = max(x, 0) + log1p(exp(-|x|)); softplus(-x) = softplus(x) - x
    sp_pos = jnp.maximum(x, 0.0) + jnp.log1p(jnp.exp(-jnp.abs(x)))
    sp_neg = sp_pos - x
    loss = sp_pos + y * (pos_weight * sp_neg - sp_pos)

    # Mask the n0-prefix columns and any ragged / stale-VMEM block tails.
    # Conditions are built only when statically required (trace-time flags),
    # so aligned shapes with n0 == 0 pay zero masking cost.
    rb, cb = x.shape
    conds = []
    if mask_rows:
        row_ids = row_off + lax.broadcasted_iota(jnp.int32, (rb, cb), 0)
        conds.append(row_ids < n_rows)
    if col_lo > 0 or mask_col_hi:
        col_ids = col_off + lax.broadcasted_iota(jnp.int32, (rb, cb), 1)
        if col_lo > 0:
            conds.append(col_ids >= col_lo)
        if mask_col_hi:
            conds.append(col_ids < n_cols)
    if conds:
        loss = jnp.where(functools.reduce(operator.and_, conds), loss, 0.0)

    # Sublane-only partial reduction; the tiny cross-lane sum and the
    # (w / n_valid) scale run outside the kernel.
    return jnp.sum(loss, axis=0, keepdims=True)


def _vloss_block_kernel(y_ref, x_ref, out_ref, *, block_b, block_s, **consts):
    i = pl.program_id(0)
    j = pl.program_id(1)
    out_ref[...] = _bce_partial(
        y_ref[...], x_ref[...], i * block_b, j * block_s, **consts)


def _vloss_single_kernel(y_ref, x_ref, out_ref, **consts):
    out_ref[...] = _bce_partial(y_ref[...], x_ref[...], 0, 0, **consts)


def _choose_blocks(n_rows, n_cols, itemsize, vmem_per_buf=1 << 20):
    """Pick (block_b, block_s) so the padded (8x128-tiled) VMEM footprint of one
    input block stays near `vmem_per_buf` (x 2 inputs x 2 pipeline buffers)."""
    bb = n_rows if n_rows <= 512 else 512                        # full dim or x8
    cols_budget = vmem_per_buf // (_round_up(bb, _SUBLANES) * itemsize)
    cols_budget = max(_LANES, (cols_budget // _LANES) * _LANES)
    bs = n_cols if n_cols <= cols_budget else cols_budget        # full dim or x128
    if bs == n_cols and n_rows > bb:
        # Whole rows fit: spend the leftover budget on more rows per block.
        rows_budget = vmem_per_buf // (_round_up(n_cols, _LANES) * itemsize)
        rows_budget = max(_SUBLANES, (rows_budget // _SUBLANES) * _SUBLANES)
        bb = n_rows if n_rows <= rows_budget else rows_budget
    return bb, bs


def vloss_forward(xs, hat_xs, *, w=1.0, pos_weight=1.0, n0=0,
                  block_b=None, block_s=None):
    """Equivalent of VLoss(w, pos_weight, n0).forward(xs, hat_xs).

    torch's .squeeze() only reshapes and the BCE mean runs over all elements,
    so it is dropped here (also robust to batch == 1).
    """
    if xs.shape != hat_xs.shape:
        raise ValueError("xs / hat_xs shape mismatch")
    if xs.ndim < 2:
        raise ValueError("VLoss expects inputs with at least 2 dims")

    B = int(xs.shape[0])
    trailing = 1
    for d in xs.shape[2:]:
        trailing *= int(d)
    n_cols = int(xs.shape[1]) * trailing
    col_lo = int(n0) * trailing                    # xs[:, n0:] => columns >= n0*trailing
    n_valid = B * (n_cols - col_lo)
    if n_valid <= 0:
        raise ValueError("VLoss: empty slice (n0 >= xs.shape[1]); mean undefined.")

    # Row-major flatten of the non-batch dims is a free (bitcast) reshape; the
    # n0 slice and lane padding are handled by in-kernel masking instead of
    # materialising sliced / padded copies in HBM.
    y2 = xs.reshape(B, n_cols)
    x2 = hat_xs.reshape(B, n_cols)

    itemsize = max(xs.dtype.itemsize, hat_xs.dtype.itemsize)
    auto_bb, auto_bs = _choose_blocks(B, n_cols, itemsize)
    bb = auto_bb if block_b is None else int(block_b)
    bs = auto_bs if block_s is None else int(block_s)
    n_rb = -(-B // bb)
    n_cb = -(-n_cols // bs)

    consts = dict(
        n_rows=B,
        n_cols=n_cols,
        col_lo=col_lo,
        mask_rows=(B % bb) != 0,
        mask_col_hi=(n_cols % bs) != 0,
        pos_weight=float(pos_weight),
    )

    if n_rb == 1 and n_cb == 1:
        # Grid-less single-block fast path: whole slab resident in VMEM, no
        # grid loop or double-buffering machinery.
        partials = pl.pallas_call(
            functools.partial(_vloss_single_kernel, **consts),
            out_shape=jax.ShapeDtypeStruct((1, n_cols), jnp.float32),
        )(y2, x2)
    else:
        partials = pl.pallas_call(
            functools.partial(_vloss_block_kernel, block_b=bb, block_s=bs, **consts),
            out_shape=jax.ShapeDtypeStruct((n_rb, n_cb * bs), jnp.float32),
            grid_spec=pltpu.PrefetchScalarGridSpec(
                num_scalar_prefetch=0,
                grid=(n_rb, n_cb),
                in_specs=[
                    pl.BlockSpec((bb, bs), lambda i, j: (i, j)),
                    pl.BlockSpec((bb, bs), lambda i, j: (i, j)),
                ],
                out_specs=pl.BlockSpec((1, bs), lambda i, j: (i, j)),
            ),
            compiler_params=pltpu.CompilerParams(
                dimension_semantics=("parallel", "parallel"),
            ),
        )(y2, x2)

    # Final tiny cross-lane reduction + scaling in plain JAX.
    return (float(w) / float(n_valid)) * jnp.sum(partials)


def _vloss_reference(xs, hat_xs, *, w=1.0, pos_weight=1.0, n0=0):
    """Pure-JAX reference matching torch.nn.BCEWithLogitsLoss(pos_weight)."""
    y = xs[:, n0:].astype(jnp.float32)
    x = hat_xs[:, n0:].astype(jnp.float32)
    sp_pos = jnp.maximum(x, 0.0) + jnp.log1p(jnp.exp(-jnp.abs(x)))
    sp_neg = sp_pos - x
    loss = pos_weight * y * sp_neg + (1.0 - y) * sp_pos
    return w * jnp.mean(loss)


if __name__ == "__main__":
    key = jax.random.PRNGKey(0)
    k1, k2, k3, k4, k5, k6 = jax.random.split(key, 6)

    # Case 1: small f32, n0 > 0 -> grid-less single-block fast path + n0 mask.
    B, S = 4, 100
    xs = jax.random.bernoulli(k1, p=0.3, shape=(B, S)).astype(jnp.float32)
    hat_xs = jax.random.normal(k2, (B, S), dtype=jnp.float32)
    out = jax.block_until_ready(vloss_forward(xs, hat_xs, w=1.0, pos_weight=2.0, n0=2))
    ref = _vloss_reference(xs, hat_xs, w=1.0, pos_weight=2.0, n0=2)
    assert jnp.allclose(out, ref, rtol=1e-5, atol=1e-6), (out, ref)

    # Case 2: bf16 inputs, forced small blocks -> 2-D grid with ragged row and
    # column blocks (partial DMAs + in-kernel masking), n0 > 0.
    B2, S2 = 10, 530
    xs2 = jax.random.bernoulli(k3, p=0.2, shape=(B2, S2)).astype(jnp.bfloat16)
    hat_xs2 = jax.random.normal(k4, (B2, S2), dtype=jnp.float32).astype(jnp.bfloat16)
    out2 = jax.block_until_ready(
        vloss_forward(xs2, hat_xs2, w=0.5, pos_weight=3.0, n0=3, block_b=8, block_s=256))
    ref2 = _vloss_reference(xs2, hat_xs2, w=0.5, pos_weight=3.0, n0=3)
    assert jnp.allclose(out2, ref2, rtol=1e-4, atol=1e-5), (out2, ref2)

    # Case 3: f32 where the default block chooser produces a real 2-D grid
    # (B=1030 -> 512-row blocks with a ragged tail; S=700 -> 512-col blocks).
    B3, S3 = 1030, 700
    xs3 = jax.random.bernoulli(k5, p=0.4, shape=(B3, S3)).astype(jnp.float32)
    hat_xs3 = jax.random.normal(k6, (B3, S3), dtype=jnp.float32)
    out3 = jax.block_until_ready(vloss_forward(xs3, hat_xs3, w=2.0, pos_weight=1.5, n0=5))
    ref3 = _vloss_reference(xs3, hat_xs3, w=2.0, pos_weight=1.5, n0=5)
    assert jnp.allclose(out3, ref3, rtol=1e-4, atol=1e-5), (out3, ref3)

    print("KERNEL_OK")
</pallas_src>

<mosaic_0001>
module attributes {stable_mosaic.version = 11 : i64} {
  func.func @_vloss_single_kernel(%arg0: memref<4x100xf32, #tpu.memory_space<vmem>>, %arg1: memref<4x100xf32, #tpu.memory_space<vmem>>, %arg2: memref<1x100xf32, #tpu.memory_space<vmem>>) attributes {dimension_semantics = [], scalar_prefetch = 0 : i64, scratch_operands = 0 : i64, tpu.core_type = #tpu.core_type<tc>} {
    %c0 = arith.constant 0 : index
    %c0_0 = arith.constant 0 : index
    %0 = vector.load %arg0[%c0, %c0_0] : memref<4x100xf32, #tpu.memory_space<vmem>>, vector<4x100xf32>
    %c0_1 = arith.constant 0 : index
    %c0_2 = arith.constant 0 : index
    %1 = vector.load %arg1[%c0_1, %c0_2] : memref<4x100xf32, #tpu.memory_space<vmem>>, vector<4x100xf32>
    %cst = arith.constant 0.000000e+00 : f32
    %2 = vector.broadcast %cst : f32 to vector<4x100xf32>
    %3 = arith.maximumf %1, %2 : vector<4x100xf32>
    %4 = math.absf %1 : vector<4x100xf32>
    %cst_3 = arith.constant 0.000000e+00 : f32
    %5 = vector.broadcast %cst_3 : f32 to vector<4x100xf32>
    %6 = arith.subf %5, %4 : vector<4x100xf32>
    %7 = math.exp %6 : vector<4x100xf32>
    %8 = math.log1p %7 : vector<4x100xf32>
    %9 = arith.addf %3, %8 : vector<4x100xf32>
    %10 = arith.subf %9, %1 : vector<4x100xf32>
    %cst_4 = arith.constant 2.000000e+00 : f32
    %11 = vector.broadcast %cst_4 : f32 to vector<4x100xf32>
    %12 = arith.mulf %11, %10 : vector<4x100xf32>
    %13 = arith.subf %12, %9 : vector<4x100xf32>
    %14 = arith.mulf %0, %13 : vector<4x100xf32>
    %15 = arith.addf %9, %14 : vector<4x100xf32>
    %16 = tpu.iota {dimensions = array<i32: 1>} : vector<4x100xi32>
    %c0_i32 = arith.constant 0 : i32
    %17 = vector.broadcast %c0_i32 : i32 to vector<4x100xi32>
    %18 = arith.addi %17, %16 : vector<4x100xi32>
    %c2_i32 = arith.constant 2 : i32
    %19 = vector.broadcast %c2_i32 : i32 to vector<4x100xi32>
    %20 = arith.cmpi sge, %18, %19 : vector<4x100xi32>
    %cst_5 = arith.constant 0.000000e+00 : f32
    %21 = vector.broadcast %cst_5 : f32 to vector<4x100xf32>
    %22 = arith.select %20, %15, %21 : vector<4x100xi1>, vector<4x100xf32>
    %cst_6 = arith.constant dense<0.000000e+00> : vector<100xf32>
    %23 = vector.multi_reduction <add>, %22, %cst_6 [0] : vector<4x100xf32> to vector<100xf32>
    %24 = vector.shape_cast %23 : vector<100xf32> to vector<1x100xf32>
    %c0_7 = arith.constant 0 : index
    %c0_8 = arith.constant 0 : index
    %25 = vector.load %arg2[%c0_7, %c0_8] : memref<1x100xf32, #tpu.memory_space<vmem>>, vector<1x100xf32>
    tpu.vector_store %arg2[%c0_7, %c0_8], %24 {strides = array<i32>} : memref<1x100xf32, #tpu.memory_space<vmem>>, vector<1x100xf32>,
    return
  }
}

</mosaic_0001>

<llo_original>
// kernel: tpu_custom_call.1
$region0: #{tpu_custom_call.1}
  #allocation0 [shape = 'u32[]', space=smem, size = 0x4, offset = 0x4, fixed_abs, tag = 'smem constant byte address 0x4 - core index']
  #allocation1 [shape = 'u32[144,128]{1,0:T(1,128)}', space=vmem, size = 0x12000, scoped, tag = 'internal scratch']
  %s0 = inlined_call_operand.hbm [shape: f32[4,100], index: 0, kind: input, shape index: {}]
  %s1 = inlined_call_operand.hbm [shape: f32[4,100], index: 1, kind: input, shape index: {}]
  %s2 = inlined_call_operand.hbm [shape: f32[1,100], index: 2, kind: output, shape index: {}]
  %s3 = sld [smem:[#allocation0]]
  $region26: #{tpu_custom_call.1} parent=0
    _
  %s5 = ssub.s32 1, %s3
  %s6 = scalar_select 0, %s5, %s3
  $region1: #{tpu_custom_call.1} parent=0
    #allocation2 [shape = 'u8[2048]{0}', space=vmem, size = 0x800, scoped, tag = 'input window, operand 0, single buffered']
    #allocation3 [shape = 's32[1]{0}', space=sflag, size = 0x4, scoped, tag = 'scoped memory for tpu_custom_call.1']
    #allocation4 [shape = 's32[1]{0}', space=sflag, size = 0x4, scoped, tag = 'scoped memory for tpu_custom_call.1']
    #allocation5 [shape = 'u8[2048]{0}', space=vmem, size = 0x800, scoped, tag = 'input window, operand 1, single buffered']
    #allocation6 [shape = 's32[1]{0}', space=sflag, size = 0x4, scoped, tag = 'scoped memory for tpu_custom_call.1']
    #allocation7 [shape = 'u8[512]{0}', space=vmem, size = 0x400, scoped, tag = 'output window, operand 0, single buffered']
    %7 = vsyncpa [#allocation3], 0
    %8 = vsyncpa [#allocation6], 0
    %9 = vsyncpa [#allocation4], 0
    // Predicated region
    $region2: #{tpu_custom_call.1} parent=1 // pred_check
      _
    $region3: #{tpu_custom_call.1} parent=1 // pred_check_branch
      %11 = sbr.rel (0) target = $region5
    $region4: #{tpu_custom_call.1} parent=1 // pred_region
      %s13 = ssub.s32 64, 64
      %14 = vsyncadd [#allocation3], %s13
      %s16 = sshll.u32 [#allocation2], 4
      %s17 = int_to_ptr.vmem [resolvable:$true] %s16
      %19 = dma.hbm_to_vmem [thread:$0]  %s0, 64, %s17, [#allocation3]
    $region5: #{tpu_custom_call.1} parent=1 // pred_fallthru
      _
    // Predicated region
    $region6: #{tpu_custom_call.1} parent=1 // pred_check
      _
    $region7: #{tpu_custom_call.1} parent=1 // pred_check_branch
      %21 = sbr.rel (0) target = $region9
    $region8: #{tpu_custom_call.1} parent=1 // pred_region
      %s23 = ssub.s32 64, 64
      %24 = vsyncadd [#allocation6], %s23
      %s26 = sshll.u32 [#allocation5], 4
      %s27 = int_to_ptr.vmem [resolvable:$true] %s26
      %29 = dma.hbm_to_vmem [thread:$0]  %s1, 64, %s27, [#allocation6]
    $region9: #{tpu_custom_call.1} parent=1 // pred_fallthru
      _
    // Predicated region
    $region10: #{tpu_custom_call.1} parent=1 // pred_check
      _
    $region11: #{tpu_custom_call.1} parent=1 // pred_check_branch
      %31 = sbr.rel (0) target = $region13
    $region12: #{tpu_custom_call.1} parent=1 // pred_region
      %32 = dma.done [#allocation3], 64
    $region13: #{tpu_custom_call.1} parent=1 // pred_fallthru
      _
    // Predicated region
    $region14: #{tpu_custom_call.1} parent=1 // pred_check
      _
    $region15: #{tpu_custom_call.1} parent=1 // pred_check_branch
      %34 = sbr.rel (0) target = $region17
    $region16: #{tpu_custom_call.1} parent=1 // pred_region
      %35 = dma.done [#allocation6], 64
    $region17: #{tpu_custom_call.1} parent=1 // pred_fallthru
      _
    %v36 = vld [vmem:[#allocation2] sm:$0xf]
    %v37 = vld [vmem:[#allocation5] sm:$0xf]
    %v38 = vmax.f32 %v37, 0.0
    %v39 = vand.u32 2147483647, %v37
    %v40 = vsub.f32 0.0, %v39
    %v41 = vmul.f32 %v40, 1.442695
    %v42 = vpow.pop %v41
    %v43 = vadd.f32 %v42, 1.0
    %v44 = vlog2.pop %v43
    %v45 = vmul.f32 %v44, 0.6931472
    %v46 = vmul.f32 -0.5, %v42
    %v47 = vadd.f32 %v46, 1.0
    %v48 = vmul.f32 %v47, %v42
    %v49 = vand.u32 2147483647, %v42
    %vm50 = vcmp.lt.f32.partialorder %v49, 0.0004427343
    %v51 = vsel %vm50, %v48, %v45
    %v52 = vadd.f32 %v38, %v51
    %v53 = vsub.f32 %v52, %v37
    %v54 = vmul.f32 %v53, 2.0
    %v55 = vsub.f32 %v54, %v52
    %v56 = vmul.f32 %v36, %v55
    %v57 = vadd.f32 %v52, %v56
    %v58 = vlaneseq
    %v59 = vand.u32 %v58, 127
    %vm60 = vcmp.ge.s32.totalorder %v59, 2
    %v61 = vsel %vm60, %v57, 0.0
    %vm62 = vcmask 814080
    %v63 = vsel %vm62, %v61, 0.0
    %v64 = vrot.slane %v63, 4
    %v65 = vadd.f32 %v63, %v64
    %v66 = vrot.slane %v65, 2
    %v67 = vadd.f32 %v65, %v66
    %v68 = vrot.slane %v67, 1
    %v69 = vadd.f32 %v67, %v68
    %vm70 = vcmask 811008
    %71 = vst.msk [vmem:[#allocation7] sm:$0x1] %vm70, %v69
    // Predicated region
    $region18: #{tpu_custom_call.1} parent=1 // pred_check
      _
    $region19: #{tpu_custom_call.1} parent=1 // pred_check_branch
      %73 = sbr.rel (0) target = $region21
    $region20: #{tpu_custom_call.1} parent=1 // pred_region
      %s75 = ssub.s32 16, 16
      %76 = vsyncadd [#allocation4], %s75
      %s78 = sshll.u32 [#allocation7], 4
      %s79 = int_to_ptr.vmem [resolvable:$true] %s78
      %81 = dma.vmem_to_hbm [thread:$0]  %s79, 16, %s2, [#allocation4]
    $region21: #{tpu_custom_call.1} parent=1 // pred_fallthru
      _
    // Predicated region
    $region22: #{tpu_custom_call.1} parent=1 // pred_check
      _
    $region23: #{tpu_custom_call.1} parent=1 // pred_check_branch
      %83 = sbr.rel (0) target = $region25
    $region24: #{tpu_custom_call.1} parent=1 // pred_region
      %84 = dma.done [#allocation4], 16
    $region25: #{tpu_custom_call.1} parent=1 // pred_fallthru
      _
    %85 = vsyncpa [#allocation3], 1
    %86 = vsyncpa [#allocation6], 1
    %87 = vsyncpa [#allocation4], 1

</llo_original>
